<compile_context>
chip_gen: v5e
topology: v5e:2x2
jax: 0.10.0
libtpu: 0.0.40
codegen_flags: <defaults>
</compile_context>

<pallas_src>
import functools

import jax
import jax.numpy as jnp
from jax.experimental import pallas as pl
from jax.experimental.pallas import tpu as pltpu


def _make_pow_fn(p: float):
    """Specialize |x|**p at trace time (p is a Python hyperparameter)."""
    p = float(p)
    if p == 2.0:
        return lambda x: x * x                     # no abs, no transcendentals (VPU only)
    if p == 1.0:
        return jnp.abs
    if p.is_integer() and p > 0:
        ip = int(p)

        def pow_int(x):
            ax = jnp.abs(x)
            r = ax
            for _ in range(ip - 1):
                r = r * ax
            return r

        return pow_int
    # non-integer exponent: genuine pow (exp/log on the EUP) is unavoidable
    return lambda x: jnp.power(jnp.abs(x), p)


def _at_partials_kernel(s_ref, t_ref, ss_out, tt_out, st_out,
                        ss_acc, tt_acc, st_acc, *, pow_fn, rem):
    """Per-(batch, outer-spatial) partial sums of am_s^2, am_t^2, am_s*am_t."""
    i = pl.program_id(2)                           # inner spatial (streaming) step

    @pl.when(i == 0)
    def _():
        ss_acc[...] = jnp.zeros_like(ss_acc)
        tt_acc[...] = jnp.zeros_like(tt_acc)
        st_acc[...] = jnp.zeros_like(st_acc)

    s = s_ref[...].astype(jnp.float32)             # (1, C, t_hw), f32 accumulation
    t = t_ref[...].astype(jnp.float32)

    # attention-map tiles: channel (sublane) reduction of |x|^p -> (1, t_hw)
    am_s = jnp.sum(pow_fn(s), axis=1)
    am_t = jnp.sum(pow_fn(t), axis=1)

    if rem is not None:
        # ragged last spatial tile: Pallas does NOT zero the overhang of a partial
        # block, so mask the invalid lanes (select, so garbage inf/nan is discarded).
        o = pl.program_id(1)
        is_last_tile = jnp.logical_and(o == pl.num_programs(1) - 1,
                                       i == pl.num_programs(2) - 1)
        lane = jax.lax.broadcasted_iota(jnp.int32, am_s.shape, 1)
        valid = jnp.logical_or(jnp.logical_not(is_last_tile), lane < rem)
        am_s = jnp.where(valid, am_s, 0.0)
        am_t = jnp.where(valid, am_t, 0.0)

    # per-lane running sums (pure VPU adds; lane reduction deferred to the epilogue)
    ss_acc[...] += am_s * am_s
    tt_acc[...] += am_t * am_t
    st_acc[...] += am_s * am_t

    @pl.when(i == pl.num_programs(2) - 1)
    def _():
        ss = jnp.sum(ss_acc[...], axis=-1, keepdims=True)      # (1, 1), one XLU reduce
        tt = jnp.sum(tt_acc[...], axis=-1, keepdims=True)
        st = jnp.sum(st_acc[...], axis=-1, keepdims=True)
        ss_out[...] = jnp.broadcast_to(ss.reshape(1, 1, 1, 1), ss_out.shape)
        tt_out[...] = jnp.broadcast_to(tt.reshape(1, 1, 1, 1), tt_out.shape)
        st_out[...] = jnp.broadcast_to(st.reshape(1, 1, 1, 1), st_out.shape)


def make_at_loss(p: float, eps: float = 1e-6, *,
                 target_block_bytes: int = 4 << 20,   # >=2-4 MiB per input block
                 lane_cap: int = 4096):               # vreg-pressure cap on t_hw
    pow_fn = _make_pow_fn(p)
    eps = float(eps)

    def at_loss(fm_s, fm_t):
        assert fm_s.shape == fm_t.shape
        N, C, H, W = fm_s.shape
        HW = H * W
        itemsize = jnp.dtype(fm_s.dtype).itemsize

        # ---- generation-aware VMEM budget (explicit limit; 2 inputs x 2 buffers) ----
        try:
            phys_vmem = int(pltpu.get_tpu_info().vmem_capacity_bytes)
        except Exception:
            phys_vmem = 64 << 20                       # conservative (v7x per-TC VMEM)
        vmem_limit = int(min(phys_vmem // 2, 48 << 20))  # ~48 MiB v5e/v6e, ~32 MiB v7x
        input_budget = vmem_limit // 2                   # headroom for f32 intermediates

        # ---- spatial (lane) tile: size by bytes, then clamp by vregs / VMEM ----
        bytes_per_lane = C * itemsize
        lanes_target = (target_block_bytes // bytes_per_lane) // 128 * 128
        lanes_vmem = (input_budget // (4 * bytes_per_lane)) // 128 * 128  # 2 in x 2 buf
        cap = max(128, min(lane_cap, lanes_target, lanes_vmem))
        # TODO(synk): for extreme C where even a 128-lane block blows the VMEM budget,
        # add an "arbitrary" channel grid axis accumulating partial channel sums.

        if HW <= cap:
            t_hw, n_tiles, rem = HW, 1, None           # one full-extent spatial block
        else:
            t_hw = cap                                  # multiple of 128
            n_tiles = pl.cdiv(HW, t_hw)
            r = HW - (n_tiles - 1) * t_hw
            rem = None if r == t_hw else r              # ragged last tile -> in-kernel mask

        # split spatial tiles into a "parallel" outer axis so both v7x TensorCores get
        # work even when N is 1 / odd (no-op on single-core v5e/v6e)
        n_outer = 2 if (n_tiles % 2 == 0 and n_tiles >= 2) else 1
        n_inner = n_tiles // n_outer

        s = fm_s.reshape(N, C, HW)                      # metadata-only, dtype preserved
        t = fm_t.reshape(N, C, HW)

        kernel = functools.partial(_at_partials_kernel, pow_fn=pow_fn, rem=rem)
        in_spec = pl.BlockSpec((1, C, t_hw), lambda n, o, i: (n, 0, o * n_inner + i))
        out_spec = pl.BlockSpec((1, 1, 8, 128), lambda n, o, i: (n, o, 0, 0))
        out_sds = jax.ShapeDtypeStruct((N, n_outer, 8, 128), jnp.float32)

        ss_p, tt_p, st_p = pl.pallas_call(
            kernel,
            out_shape=(out_sds, out_sds, out_sds),
            grid_spec=pltpu.PrefetchScalarGridSpec(
                num_scalar_prefetch=0,
                grid=(N, n_outer, n_inner),             # spatial reduction axis last
                in_specs=[in_spec, in_spec],
                out_specs=[out_spec, out_spec, out_spec],
                scratch_shapes=[
                    pltpu.VMEM((1, t_hw), jnp.float32),  # running am_s^2 per lane
                    pltpu.VMEM((1, t_hw), jnp.float32),  # running am_t^2 per lane
                    pltpu.VMEM((1, t_hw), jnp.float32),  # running am_s*am_t per lane
                ],
            ),
            compiler_params=pltpu.CompilerParams(
                dimension_semantics=("parallel", "parallel", "arbitrary"),
                vmem_limit_bytes=vmem_limit,
            ),
        )(s, t)

        # tiny wrapper-side combine: per-batch sums over the outer split, then the
        # reassociated SSE and the mse_loss mean over (N, 1, H, W) elements
        ss = jnp.sum(ss_p[:, :, 0, 0], axis=1)          # (N,)
        tt = jnp.sum(tt_p[:, :, 0, 0], axis=1)
        st = jnp.sum(st_p[:, :, 0, 0], axis=1)
        ns = jnp.sqrt(ss) + eps                         # ||am_s||_F + eps
        nt = jnp.sqrt(tt) + eps                         # ||am_t||_F + eps
        sse = ss / (ns * ns) + tt / (nt * nt) - 2.0 * st / (ns * nt)
        return jnp.sum(sse) / jnp.float32(N * HW)

    return jax.jit(at_loss)


def at_loss_reference(fm_s, fm_t, p, eps=1e-6):
    """Pure-JAX reference mirroring the PyTorch module (f32 math)."""
    def attention_map(fm):
        fm = fm.astype(jnp.float32)
        am = jnp.power(jnp.abs(fm), p)
        am = jnp.sum(am, axis=1, keepdims=True)                  # (N,1,H,W)
        norm = jnp.sqrt(jnp.sum(am * am, axis=(2, 3), keepdims=True))
        return am / (norm + eps)

    diff = attention_map(fm_s) - attention_map(fm_t)
    return jnp.mean(diff * diff)


if __name__ == "__main__":
    p = 2.0                                   # AT exponent (module hyperparameter)

    key = jax.random.PRNGKey(0)
    k1, k2, k3, k4, k5, k6 = jax.random.split(key, 6)

    # --- test 1: small f32 maps, single full-extent spatial tile ---
    at_loss = make_at_loss(p)
    N, C, H, W = 2, 4, 16, 16
    fm_s = jax.random.normal(k1, (N, C, H, W), dtype=jnp.float32)
    fm_t = jax.random.normal(k2, (N, C, H, W), dtype=jnp.float32)
    loss = at_loss(fm_s, fm_t)
    jax.block_until_ready(loss)
    ref = at_loss_reference(fm_s, fm_t, p)
    assert jnp.allclose(loss, ref, rtol=3e-5, atol=1e-6), (loss, ref)

    # --- test 2: bf16, forced small tile -> 3 spatial tiles with a ragged (masked)
    #             last tile and multi-step accumulation on the inner axis ---
    at_loss_ragged = make_at_loss(p, lane_cap=512)
    N2, C2, H2, W2 = 2, 8, 36, 36             # HW = 1296 -> tiles of 512,512,272
    fs2 = jax.random.normal(k3, (N2, C2, H2, W2), dtype=jnp.bfloat16)
    ft2 = jax.random.normal(k4, (N2, C2, H2, W2), dtype=jnp.bfloat16)
    loss2 = at_loss_ragged(fs2, ft2)
    jax.block_until_ready(loss2)
    ref2 = at_loss_reference(fs2, ft2, p)
    assert jnp.allclose(loss2, ref2, rtol=5e-4, atol=1e-6), (loss2, ref2)

    # --- test 3: f32, N=1, forced 4 tiles -> outer parallel split (n_outer=2) with a
    #             ragged last tile; wrapper combines per-outer partials ---
    at_loss_split = make_at_loss(p, lane_cap=256)
    N3, C3, H3, W3 = 1, 8, 30, 30              # HW = 900 -> tiles of 256,256,256,132
    fs3 = jax.random.normal(k5, (N3, C3, H3, W3), dtype=jnp.float32)
    ft3 = jax.random.normal(k6, (N3, C3, H3, W3), dtype=jnp.float32)
    loss3 = at_loss_split(fs3, ft3)
    jax.block_until_ready(loss3)
    ref3 = at_loss_reference(fs3, ft3, p)
    assert jnp.allclose(loss3, ref3, rtol=3e-5, atol=1e-6), (loss3, ref3)

    print("KERNEL_OK")
</pallas_src>

<mosaic_0001>
module attributes {stable_mosaic.version = 11 : i64} {
  func.func @_at_partials_kernel(%arg0: i32, %arg1: i32, %arg2: i32, %arg3: memref<1x4x256xf32, #tpu.memory_space<vmem>>, %arg4: memref<1x4x256xf32, #tpu.memory_space<vmem>>, %arg5: memref<1x1x8x128xf32, #tpu.memory_space<vmem>>, %arg6: memref<1x1x8x128xf32, #tpu.memory_space<vmem>>, %arg7: memref<1x1x8x128xf32, #tpu.memory_space<vmem>>, %arg8: memref<1x256xf32, #tpu.memory_space<vmem>>, %arg9: memref<1x256xf32, #tpu.memory_space<vmem>>, %arg10: memref<1x256xf32, #tpu.memory_space<vmem>>) attributes {dimension_semantics = [#tpu.dimension_semantics<parallel>, #tpu.dimension_semantics<parallel>, #tpu.dimension_semantics<arbitrary>], iteration_bounds = array<i64: 2, 1, 1>, scalar_prefetch = 0 : i64, scratch_operands = 3 : i64, tpu.core_type = #tpu.core_type<tc>, window_params = [{transform_indices = @transform_0, window_bounds = array<i64: 1, 4, 256>}, {transform_indices = @transform_1, window_bounds = array<i64: 1, 4, 256>}, {transform_indices = @transform_2, window_bounds = array<i64: 1, 1, 8, 128>}, {transform_indices = @transform_3, window_bounds = array<i64: 1, 1, 8, 128>}, {transform_indices = @transform_4, window_bounds = array<i64: 1, 1, 8, 128>}]} {
    %c0_i32 = arith.constant 0 : i32
    %0 = arith.cmpi eq, %arg2, %c0_i32 : i32
    %1 = arith.extui %0 : i1 to i32
    %c0_i32_0 = arith.constant 0 : i32
    %2 = arith.cmpi ne, %1, %c0_i32_0 : i32
    scf.if %2 {
      %cst_21 = arith.constant 0.000000e+00 : f32
      %24 = vector.broadcast %cst_21 : f32 to vector<1x256xf32>
      %c0_22 = arith.constant 0 : index
      %c0_23 = arith.constant 0 : index
      %25 = vector.load %arg8[%c0_22, %c0_23] : memref<1x256xf32, #tpu.memory_space<vmem>>, vector<1x256xf32>
      tpu.vector_store %arg8[%c0_22, %c0_23], %24 {strides = array<i32>} : memref<1x256xf32, #tpu.memory_space<vmem>>, vector<1x256xf32>,
      %cst_24 = arith.constant 0.000000e+00 : f32
      %26 = vector.broadcast %cst_24 : f32 to vector<1x256xf32>
      %c0_25 = arith.constant 0 : index
      %c0_26 = arith.constant 0 : index
      %27 = vector.load %arg9[%c0_25, %c0_26] : memref<1x256xf32, #tpu.memory_space<vmem>>, vector<1x256xf32>
      tpu.vector_store %arg9[%c0_25, %c0_26], %26 {strides = array<i32>} : memref<1x256xf32, #tpu.memory_space<vmem>>, vector<1x256xf32>,
      %cst_27 = arith.constant 0.000000e+00 : f32
      %28 = vector.broadcast %cst_27 : f32 to vector<1x256xf32>
      %c0_28 = arith.constant 0 : index
      %c0_29 = arith.constant 0 : index
      %29 = vector.load %arg10[%c0_28, %c0_29] : memref<1x256xf32, #tpu.memory_space<vmem>>, vector<1x256xf32>
      tpu.vector_store %arg10[%c0_28, %c0_29], %28 {strides = array<i32>} : memref<1x256xf32, #tpu.memory_space<vmem>>, vector<1x256xf32>,
    } else {
    }
    %c0 = arith.constant 0 : index
    %c0_1 = arith.constant 0 : index
    %c0_2 = arith.constant 0 : index
    %3 = vector.load %arg3[%c0, %c0_1, %c0_2] : memref<1x4x256xf32, #tpu.memory_space<vmem>>, vector<1x4x256xf32>
    %c0_3 = arith.constant 0 : index
    %c0_4 = arith.constant 0 : index
    %c0_5 = arith.constant 0 : index
    %4 = vector.load %arg4[%c0_3, %c0_4, %c0_5] : memref<1x4x256xf32, #tpu.memory_space<vmem>>, vector<1x4x256xf32>
    %5 = arith.mulf %3, %3 : vector<1x4x256xf32>
    %cst = arith.constant dense<0.000000e+00> : vector<1x256xf32>
    %6 = vector.multi_reduction <add>, %5, %cst [1] : vector<1x4x256xf32> to vector<1x256xf32>
    %7 = arith.mulf %4, %4 : vector<1x4x256xf32>
    %cst_6 = arith.constant dense<0.000000e+00> : vector<1x256xf32>
    %8 = vector.multi_reduction <add>, %7, %cst_6 [1] : vector<1x4x256xf32> to vector<1x256xf32>
    %c0_7 = arith.constant 0 : index
    %c0_8 = arith.constant 0 : index
    %9 = vector.load %arg8[%c0_7, %c0_8] : memref<1x256xf32, #tpu.memory_space<vmem>>, vector<1x256xf32>
    %10 = arith.mulf %6, %6 : vector<1x256xf32>
    %11 = arith.addf %9, %10 : vector<1x256xf32>
    %c0_9 = arith.constant 0 : index
    %c0_10 = arith.constant 0 : index
    %12 = vector.load %arg8[%c0_9, %c0_10] : memref<1x256xf32, #tpu.memory_space<vmem>>, vector<1x256xf32>
    tpu.vector_store %arg8[%c0_9, %c0_10], %11 {strides = array<i32>} : memref<1x256xf32, #tpu.memory_space<vmem>>, vector<1x256xf32>,
    %c0_11 = arith.constant 0 : index
    %c0_12 = arith.constant 0 : index
    %13 = vector.load %arg9[%c0_11, %c0_12] : memref<1x256xf32, #tpu.memory_space<vmem>>, vector<1x256xf32>
    %14 = arith.mulf %8, %8 : vector<1x256xf32>
    %15 = arith.addf %13, %14 : vector<1x256xf32>
    %c0_13 = arith.constant 0 : index
    %c0_14 = arith.constant 0 : index
    %16 = vector.load %arg9[%c0_13, %c0_14] : memref<1x256xf32, #tpu.memory_space<vmem>>, vector<1x256xf32>
    tpu.vector_store %arg9[%c0_13, %c0_14], %15 {strides = array<i32>} : memref<1x256xf32, #tpu.memory_space<vmem>>, vector<1x256xf32>,
    %c0_15 = arith.constant 0 : index
    %c0_16 = arith.constant 0 : index
    %17 = vector.load %arg10[%c0_15, %c0_16] : memref<1x256xf32, #tpu.memory_space<vmem>>, vector<1x256xf32>
    %18 = arith.mulf %6, %8 : vector<1x256xf32>
    %19 = arith.addf %17, %18 : vector<1x256xf32>
    %c0_17 = arith.constant 0 : index
    %c0_18 = arith.constant 0 : index
    %20 = vector.load %arg10[%c0_17, %c0_18] : memref<1x256xf32, #tpu.memory_space<vmem>>, vector<1x256xf32>
    tpu.vector_store %arg10[%c0_17, %c0_18], %19 {strides = array<i32>} : memref<1x256xf32, #tpu.memory_space<vmem>>, vector<1x256xf32>,
    %c0_i32_19 = arith.constant 0 : i32
    %21 = arith.cmpi eq, %arg2, %c0_i32_19 : i32
    %22 = arith.extui %21 : i1 to i32
    %c0_i32_20 = arith.constant 0 : i32
    %23 = arith.cmpi ne, %22, %c0_i32_20 : i32
    scf.if %23 {
      %c0_21 = arith.constant 0 : index
      %c0_22 = arith.constant 0 : index
      %24 = vector.load %arg8[%c0_21, %c0_22] : memref<1x256xf32, #tpu.memory_space<vmem>>, vector<1x256xf32>
      %cst_23 = arith.constant dense<0.000000e+00> : vector<1xf32>
      %25 = vector.multi_reduction <add>, %24, %cst_23 [1] : vector<1x256xf32> to vector<1xf32>
      %26 = vector.shape_cast %25 : vector<1xf32> to vector<1x1xf32>
      %c0_24 = arith.constant 0 : index
      %c0_25 = arith.constant 0 : index
      %27 = vector.load %arg9[%c0_24, %c0_25] : memref<1x256xf32, #tpu.memory_space<vmem>>, vector<1x256xf32>
      %cst_26 = arith.constant dense<0.000000e+00> : vector<1xf32>
      %28 = vector.multi_reduction <add>, %27, %cst_26 [1] : vector<1x256xf32> to vector<1xf32>
      %29 = vector.shape_cast %28 : vector<1xf32> to vector<1x1xf32>
      %c0_27 = arith.constant 0 : index
      %c0_28 = arith.constant 0 : index
      %30 = vector.load %arg10[%c0_27, %c0_28] : memref<1x256xf32, #tpu.memory_space<vmem>>, vector<1x256xf32>
      %cst_29 = arith.constant dense<0.000000e+00> : vector<1xf32>
      %31 = vector.multi_reduction <add>, %30, %cst_29 [1] : vector<1x256xf32> to vector<1xf32>
      %32 = vector.shape_cast %31 : vector<1xf32> to vector<1x1xf32>
      %33 = vector.shape_cast %26 : vector<1x1xf32> to vector<1x1x1x1xf32>
      %34 = vector.shape_cast %33 : vector<1x1x1x1xf32> to vector<1x1x1x1xf32>
      %35 = vector.broadcast %34 : vector<1x1x1x1xf32> to vector<1x1x8x128xf32>
      %c0_30 = arith.constant 0 : index
      %c0_31 = arith.constant 0 : index
      %c0_32 = arith.constant 0 : index
      %c0_33 = arith.constant 0 : index
      %36 = vector.load %arg5[%c0_30, %c0_31, %c0_32, %c0_33] : memref<1x1x8x128xf32, #tpu.memory_space<vmem>>, vector<1x1x8x128xf32>
      tpu.vector_store %arg5[%c0_30, %c0_31, %c0_32, %c0_33], %35 {strides = array<i32>} : memref<1x1x8x128xf32, #tpu.memory_space<vmem>>, vector<1x1x8x128xf32>,
      %37 = vector.shape_cast %29 : vector<1x1xf32> to vector<1x1x1x1xf32>
      %38 = vector.shape_cast %37 : vector<1x1x1x1xf32> to vector<1x1x1x1xf32>
      %39 = vector.broadcast %38 : vector<1x1x1x1xf32> to vector<1x1x8x128xf32>
      %c0_34 = arith.constant 0 : index
      %c0_35 = arith.constant 0 : index
      %c0_36 = arith.constant 0 : index
      %c0_37 = arith.constant 0 : index
      %40 = vector.load %arg6[%c0_34, %c0_35, %c0_36, %c0_37] : memref<1x1x8x128xf32, #tpu.memory_space<vmem>>, vector<1x1x8x128xf32>
      tpu.vector_store %arg6[%c0_34, %c0_35, %c0_36, %c0_37], %39 {strides = array<i32>} : memref<1x1x8x128xf32, #tpu.memory_space<vmem>>, vector<1x1x8x128xf32>,
      %41 = vector.shape_cast %32 : vector<1x1xf32> to vector<1x1x1x1xf32>
      %42 = vector.shape_cast %41 : vector<1x1x1x1xf32> to vector<1x1x1x1xf32>
      %43 = vector.broadcast %42 : vector<1x1x1x1xf32> to vector<1x1x8x128xf32>
      %c0_38 = arith.constant 0 : index
      %c0_39 = arith.constant 0 : index
      %c0_40 = arith.constant 0 : index
      %c0_41 = arith.constant 0 : index
      %44 = vector.load %arg7[%c0_38, %c0_39, %c0_40, %c0_41] : memref<1x1x8x128xf32, #tpu.memory_space<vmem>>, vector<1x1x8x128xf32>
      tpu.vector_store %arg7[%c0_38, %c0_39, %c0_40, %c0_41], %43 {strides = array<i32>} : memref<1x1x8x128xf32, #tpu.memory_space<vmem>>, vector<1x1x8x128xf32>,
    } else {
    }
    return
  }
  func.func @transform_0(%arg0: i32, %arg1: i32, %arg2: i32) -> (i32, i32, i32) {
    %c1_i32 = arith.constant 1 : i32
    %0 = arith.muli %arg1, %c1_i32 : i32
    %1 = arith.addi %0, %arg2 : i32
    %c0_i32 = arith.constant 0 : i32
    %c0_i32_0 = arith.constant 0 : i32
    return %arg0, %c0_i32, %1 : i32, i32, i32
  }
  func.func @transform_1(%arg0: i32, %arg1: i32, %arg2: i32) -> (i32, i32, i32) {
    %c1_i32 = arith.constant 1 : i32
    %0 = arith.muli %arg1, %c1_i32 : i32
    %1 = arith.addi %0, %arg2 : i32
    %c0_i32 = arith.constant 0 : i32
    %c0_i32_0 = arith.constant 0 : i32
    return %arg0, %c0_i32, %1 : i32, i32, i32
  }
  func.func @transform_2(%arg0: i32, %arg1: i32, %arg2: i32) -> (i32, i32, i32, i32) {
    %c0_i32 = arith.constant 0 : i32
    %c0_i32_0 = arith.constant 0 : i32
    %c0_i32_1 = arith.constant 0 : i32
    return %arg0, %arg1, %c0_i32, %c0_i32_0 : i32, i32, i32, i32
  }
  func.func @transform_3(%arg0: i32, %arg1: i32, %arg2: i32) -> (i32, i32, i32, i32) {
    %c0_i32 = arith.constant 0 : i32
    %c0_i32_0 = arith.constant 0 : i32
    %c0_i32_1 = arith.constant 0 : i32
    return %arg0, %arg1, %c0_i32, %c0_i32_0 : i32, i32, i32, i32
  }
  func.func @transform_4(%arg0: i32, %arg1: i32, %arg2: i32) -> (i32, i32, i32, i32) {
    %c0_i32 = arith.constant 0 : i32
    %c0_i32_0 = arith.constant 0 : i32
    %c0_i32_1 = arith.constant 0 : i32
    return %arg0, %arg1, %c0_i32, %c0_i32_0 : i32, i32, i32, i32
  }
}

</mosaic_0001>

<llo_original>
// kernel: at_loss.1
$region0: #{at_loss.1}
  #allocation0 [shape = 'u32[]', space=smem, size = 0x4, offset = 0x4, fixed_abs, tag = 'smem constant byte address 0x4 - core index']
  #allocation1 [shape = 'u32[72,128]{1,0:T(1,128)}', space=vmem, size = 0x9000, scoped, tag = 'internal scratch']
  #allocation2 [shape = 'f32[1,256]{1,0:T(1,128)}', space=vmem, size = 0x400, scoped, tag = 'scratch operand']
  #allocation3 [shape = 'f32[1,256]{1,0:T(1,128)}', space=vmem, size = 0x400, scoped, tag = 'scratch operand']
  #allocation4 [shape = 'f32[1,256]{1,0:T(1,128)}', space=vmem, size = 0x400, scoped, tag = 'scratch operand']
  %s0 = inlined_call_operand.vmem [shape: f32[2,4,256], index: 0, kind: input, shape index: {}]
  %s1 = inlined_call_operand.vmem [shape: f32[2,4,256], index: 1, kind: input, shape index: {}]
  %s2 = inlined_call_operand.vmem [shape: f32[2,1,8,128], index: 2, kind: output, shape index: {0}]
  %s3 = inlined_call_operand.vmem [shape: f32[2,1,8,128], index: 3, kind: output, shape index: {1}]
  %s4 = inlined_call_operand.vmem [shape: f32[2,1,8,128], index: 4, kind: output, shape index: {2}]
  %5 = xla_tuple %s2, %s3, %s4
  %s6 = sld [smem:[#allocation0]]
  $region65: #{at_loss.1} parent=0
    _
  %s8 = ssub.s32 1, %s6
  %s9 = scalar_select 0, %s8, %s6
  loop: start=0, step=1, limit=4
  $region2: #{at_loss.1} parent=0 // loop_pre_header
    _
  $region3: #{at_loss.1} parent=0 // loop_header
    %s11 = sphi 0, %s15
    %p12 = scmp.ge.s32.totalorder %s11, 4
    %s18 = sphi 0, %s37
    %s19 = sphi 0, %s33
    %s20 = sphi 0, %s29
    %s21 = sphi 0, %s18
    %s22 = sphi 0, %s19
    %s23 = sphi 0, %s20
    %s24 = sphi 0, %s21
    %s25 = sphi 0, %s22
    %s26 = sphi 0, %s23
    %s44 = sphi 0, %s46
    %s47 = sphi 0, %s44
    %s48 = sphi 0, %s47
    %s64 = sphi 0, %s48
    %s74 = sphi 0, %s76
    %s77 = sphi 0, %s74
    %s78 = sphi 0, %s77
    %s94 = sphi 0, %s78
    %s102 = sphi 0, %s104
    %s105 = sphi 0, %s102
    %s106 = sphi 0, %s105
    %s122 = sphi 0, %s106
    %s130 = sphi 0, %s132
    %s133 = sphi 0, %s130
    %s134 = sphi 0, %s133
    %s150 = sphi 0, %s134
    %s158 = sphi 0, %s160
    %s161 = sphi 0, %s158
    %s162 = sphi 0, %s161
    %s178 = sphi 0, %s162
  $region4: #{at_loss.1} parent=0 // loop_header_branch
    %14 = sbr.rel (%p12) target = $region8
  $region5: #{at_loss.1} parent=0 // loop_body
    %s16 = ssub.s32 %s11, 1
    %s17 = ssub.s32 %s11, 2
    %s27 = sadd.s32 1, %s20
    %p28 = scmp.ge.s32.totalorder %s27, 1
    %s29 = scalar_select %p28, 0, %s27
    %s30 = sadd.s32 1, %s19
    %s31 = scalar_select %p28, %s30, %s19
    %p32 = scmp.ge.s32.totalorder %s31, 1
    %s33 = scalar_select %p32, 0, %s31
    %s34 = sadd.s32 1, %s18
    %s35 = scalar_select %p32, %s34, %s18
    %p36 = scmp.ge.s32.totalorder %s35, 2
    %s37 = scalar_select %p36, 0, %s35
    %s38 = sadd.s32 %s19, %s20
    %s39 = sadd.s32 %s33, %s29
    %s40 = ssub.s32 %s18, %s37
    %s41 = ssub.s32 %s38, %s39
    %s42 = sor.u32 %s40, %s41
    %p43 = scmp.eq.s32.totalorder %s42, 0
    %s45 = sadd.s32 %s44, 1
    %s46 = scalar_select %p43, %s44, %s45
    %p49 = pneg %p43
    %p50 = scmp.eq.s32.totalorder %s11, 1
    %p51 = por %p49, %p50
    %p52 = scmp.ne.s32.totalorder %s44, %s47
    %p53 = scmp.eq.s32.totalorder %s11, 0
    %p54 = por %p52, %p53
    %p55 = scmp.ne.s32.totalorder %s44, %s47
    %p56 = scmp.eq.s32.totalorder %s16, 1
    %p57 = por %p55, %p56
    %p58 = scmp.ne.s32.totalorder %s47, %s48
    %p59 = scmp.eq.s32.totalorder %s16, 0
    %p60 = por %p58, %p59
    %p61 = scmp.ne.s32.totalorder %s47, %s48
    %p62 = scmp.eq.s32.totalorder %s17, 1
    %p63 = por %p61, %p62
    %p65 = scmp.ne.s32.totalorder %s48, %s64
    %p66 = scmp.eq.s32.totalorder %s17, 0
    %p67 = por %p65, %p66
    %s68 = sadd.s32 %s19, %s20
    %s69 = sadd.s32 %s33, %s29
    %s70 = ssub.s32 %s18, %s37
    %s71 = ssub.s32 %s68, %s69
    %s72 = sor.u32 %s70, %s71
    %p73 = scmp.eq.s32.totalorder %s72, 0
    %s75 = sadd.s32 %s74, 1
    %s76 = scalar_select %p73, %s74, %s75
    %p79 = pneg %p73
    %p80 = scmp.eq.s32.totalorder %s11, 1
    %p81 = por %p79, %p80
    %p82 = scmp.ne.s32.totalorder %s74, %s77
    %p83 = scmp.eq.s32.totalorder %s11, 0
    %p84 = por %p82, %p83
    %p85 = scmp.ne.s32.totalorder %s74, %s77
    %p86 = scmp.eq.s32.totalorder %s16, 1
    %p87 = por %p85, %p86
    %p88 = scmp.ne.s32.totalorder %s77, %s78
    %p89 = scmp.eq.s32.totalorder %s16, 0
    %p90 = por %p88, %p89
    %p91 = scmp.ne.s32.totalorder %s77, %s78
    %p92 = scmp.eq.s32.totalorder %s17, 1
    %p93 = por %p91, %p92
    %p95 = scmp.ne.s32.totalorder %s78, %s94
    %p96 = scmp.eq.s32.totalorder %s17, 0
    %p97 = por %p95, %p96
    %s98 = ssub.s32 %s18, %s37
    %s99 = ssub.s32 %s19, %s33
    %s100 = sor.u32 %s98, %s99
    %p101 = scmp.eq.s32.totalorder %s100, 0
    %s103 = sadd.s32 %s102, 1
    %s104 = scalar_select %p101, %s102, %s103
    %p107 = pneg %p101
    %p108 = scmp.eq.s32.totalorder %s11, 1
    %p109 = por %p107, %p108
    %p110 = scmp.ne.s32.totalorder %s102, %s105
    %p111 = scmp.eq.s32.totalorder %s11, 0
    %p112 = por %p110, %p111
    %p113 = scmp.ne.s32.totalorder %s102, %s105
    %p114 = scmp.eq.s32.totalorder %s16, 1
    %p115 = por %p113, %p114
    %p116 = scmp.ne.s32.totalorder %s105, %s106
    %p117 = scmp.eq.s32.totalorder %s16, 0
    %p118 = por %p116, %p117
    %p119 = scmp.ne.s32.totalorder %s105, %s106
    %p120 = scmp.eq.s32.totalorder %s17, 1
    %p121 = por %p119, %p120
    %p123 = scmp.ne.s32.totalorder %s106, %s122
    %p124 = scmp.eq.s32.totalorder %s17, 0
    %p125 = por %p123, %p124
    %s126 = ssub.s32 %s18, %s37
    %s127 = ssub.s32 %s19, %s33
    %s128 = sor.u32 %s126, %s127
    %p129 = scmp.eq.s32.totalorder %s128, 0
    %s131 = sadd.s32 %s130, 1
    %s132 = scalar_select %p129, %s130, %s131
    %p135 = pneg %p129
    %p136 = scmp.eq.s32.totalorder %s11, 1
    %p137 = por %p135, %p136
    %p138 = scmp.ne.s32.totalorder %s130, %s133
    %p139 = scmp.eq.s32.totalorder %s11, 0
    %p140 = por %p138, %p139
    %p141 = scmp.ne.s32.totalorder %s130, %s133
    %p142 = scmp.eq.s32.totalorder %s16, 1
    %p143 = por %p141, %p142
    %p144 = scmp.ne.s32.totalorder %s133, %s134
    %p145 = scmp.eq.s32.totalorder %s16, 0
    %p146 = por %p144, %p145
    %p147 = scmp.ne.s32.totalorder %s133, %s134
    %p148 = scmp.eq.s32.totalorder %s17, 1
    %p149 = por %p147, %p148
    %p151 = scmp.ne.s32.totalorder %s134, %s150
    %p152 = scmp.eq.s32.totalorder %s17, 0
    %p153 = por %p151, %p152
    %s154 = ssub.s32 %s18, %s37
    %s155 = ssub.s32 %s19, %s33
    %s156 = sor.u32 %s154, %s155
    %p157 = scmp.eq.s32.totalorder %s156, 0
    %s159 = sadd.s32 %s158, 1
    %s160 = scalar_select %p157, %s158, %s159
    %p163 = pneg %p157
    %p164 = scmp.eq.s32.totalorder %s11, 1
    %p165 = por %p163, %p164
    %p166 = scmp.ne.s32.totalorder %s158, %s161
    %p167 = scmp.eq.s32.totalorder %s11, 0
    %p168 = por %p166, %p167
    %p169 = scmp.ne.s32.totalorder %s158, %s161
    %p170 = scmp.eq.s32.totalorder %s16, 1
    %p171 = por %p169, %p170
    %p172 = scmp.ne.s32.totalorder %s161, %s162
    %p173 = scmp.eq.s32.totalorder %s16, 0
    %p174 = por %p172, %p173
    %p175 = scmp.ne.s32.totalorder %s161, %s162
    %p176 = scmp.eq.s32.totalorder %s17, 1
    %p177 = por %p175, %p176
    %p179 = scmp.ne.s32.totalorder %s162, %s178
    %p180 = scmp.eq.s32.totalorder %s17, 0
    %p181 = por %p179, %p180
    %p182 = scmp.le.s32.totalorder 1, %s11
    %p183 = scmp.lt.s32.totalorder %s11, 3
    %p184 = pnand %p182, %p183
    %p185 = pneg %p184
    // Predicated region
    $region9: #{at_loss.1} parent=5 // pred_check
      _
    $region10: #{at_loss.1} parent=5 // pred_check_branch
      %187 = sbr.rel (%p184) target = $region12
    $region11: #{at_loss.1} parent=5 // pred_region
      %s188 = ssub.s32 %s11, 1
    $region12: #{at_loss.1} parent=5 // pred_fallthru
      _
    %p189 = scmp.lt.s32.totalorder %s11, 2
    // Predicated region
    $region13: #{at_loss.1} parent=5 // pred_check
      %p190 = pneg %p189
    $region14: #{at_loss.1} parent=5 // pred_check_branch
      %192 = sbr.rel (%p190) target = $region16
    $region15: #{at_loss.1} parent=5 // pred_region
      // Predicated region
      $region17: #{at_loss.1} parent=15 // pred_check
        %p193 = pneg %p54
      $region18: #{at_loss.1} parent=15 // pred_check_branch
        %195 = sbr.rel (%p193) target = $region20
      $region19: #{at_loss.1} parent=15 // pred_region
        %s196 = sadd.s32 %s19, %s20
        %s197 = smul.u32 2, %s196
        %p198 = scmp.lt.s32.totalorder %s18, 1
        %s199 = scalar_select %p198, %s18, 1
        %p200 = scmp.lt.s32.totalorder %s197, 1
        %s201 = scalar_select %p200, %s197, 1
        %s202 = smul.addr %s199, 2
        %s203 = sadd.s32 %s201, %s202
        %s204 = smul.addr %s203, 4
        %s205 = scalar_lea.vmem %s0, %s204
        %s206 = sadd.s32 %s19, %s20
        %s207 = smul.u32 2, %s206
      $region20: #{at_loss.1} parent=15 // pred_fallthru
        _
      // Predicated region
      $region21: #{at_loss.1} parent=15 // pred_check
        %p208 = pneg %p84
      $region22: #{at_loss.1} parent=15 // pred_check_branch
        %210 = sbr.rel (%p208) target = $region24
      $region23: #{at_loss.1} parent=15 // pred_region
        %s211 = sadd.s32 %s19, %s20
        %s212 = smul.u32 2, %s211
        %p213 = scmp.lt.s32.totalorder %s18, 1
        %s214 = scalar_select %p213, %s18, 1
        %p215 = scmp.lt.s32.totalorder %s212, 1
        %s216 = scalar_select %p215, %s212, 1
        %s217 = smul.addr %s214, 2
        %s218 = sadd.s32 %s216, %s217
        %s219 = smul.addr %s218, 4
        %s220 = scalar_lea.vmem %s1, %s219
        %s221 = sadd.s32 %s19, %s20
        %s222 = smul.u32 2, %s221
      $region24: #{at_loss.1} parent=15 // pred_fallthru
        _
    $region16: #{at_loss.1} parent=5 // pred_fallthru
      _
    %p223 = scmp.le.s32.totalorder 1, %s11
    %p224 = scmp.lt.s32.totalorder %s11, 3
    %p225 = pnand %p223, %p224
    %p226 = pneg %p225
    // Predicated region
    $region25: #{at_loss.1} parent=5 // pred_check
      _
    $region26: #{at_loss.1} parent=5 // pred_check_branch
      %228 = sbr.rel (%p225) target = $region28
    $region27: #{at_loss.1} parent=5 // pred_region
      %s229 = ssub.s32 %s11, 1
      %s230 = sadd.s32 %s22, %s23
      %s231 = smul.u32 2, %s230
      %p232 = scmp.lt.s32.totalorder %s21, 1
      %s233 = scalar_select %p232, %s21, 1
      %p234 = scmp.lt.s32.totalorder %s231, 1
      %s235 = scalar_select %p234, %s231, 1
      %s236 = smul.addr %s233, 2
      %s237 = sadd.s32 %s235, %s236
      %s238 = smul.addr %s237, 4
      %s239 = scalar_lea.vmem %s0, %s238
      %p240 = pneg %p60
      %p241 = pneg %p57
      %s242 = sadd.s32 %s22, %s23
      %s243 = smul.u32 2, %s242
      %p244 = scmp.lt.s32.totalorder %s21, 1
      %s245 = scalar_select %p244, %s21, 1
      %p246 = scmp.lt.s32.totalorder %s243, 1
      %s247 = scalar_select %p246, %s243, 1
      %s248 = smul.addr %s245, 2
      %s249 = sadd.s32 %s247, %s248
      %s250 = smul.addr %s249, 4
      %s251 = scalar_lea.vmem %s1, %s250
      %p252 = pneg %p90
      %p253 = pneg %p87
      %p254 = pneg %p118
      %p255 = pneg %p115
      %p256 = scmp.lt.s32.totalorder %s21, 1
      %s257 = scalar_select %p256, %s21, 1
      %p258 = scmp.lt.s32.totalorder %s22, 0
      %s259 = scalar_select %p258, %s22, 0
      %s260 = sadd.s32 %s259, %s257
      %s261 = smul.addr %s260, 8
      %s262 = scalar_lea.vmem %s2, %s261
      %p263 = pneg %p146
      %p264 = pneg %p143
      %p265 = scmp.lt.s32.totalorder %s21, 1
      %s266 = scalar_select %p265, %s21, 1
      %p267 = scmp.lt.s32.totalorder %s22, 0
      %s268 = scalar_select %p267, %s22, 0
      %s269 = sadd.s32 %s268, %s266
      %s270 = smul.addr %s269, 8
      %s271 = scalar_lea.vmem %s3, %s270
      %p272 = pneg %p174
      %p273 = pneg %p171
      %p274 = scmp.lt.s32.totalorder %s21, 1
      %s275 = scalar_select %p274, %s21, 1
      %p276 = scmp.lt.s32.totalorder %s22, 0
      %s277 = scalar_select %p276, %s22, 0
      %s278 = sadd.s32 %s277, %s275
      %s279 = smul.addr %s278, 8
      %s280 = scalar_lea.vmem %s4, %s279
      %s281 = sadd.s32 %s22, %s23
      %s282 = smul.u32 2, %s281
      %p283 = scmp.lt.s32.totalorder %s21, 1
      %s284 = scalar_select %p283, %s21, 1
      %p285 = scmp.lt.s32.totalorder %s282, 1
      %s286 = scalar_select %p285, %s282, 1
      %s287 = smul.addr %s284, 2
      %s288 = sadd.s32 %s286, %s287
      %s289 = smul.addr %s288, 4
      %s290 = scalar_lea.vmem %s0, %s289
      %s291 = sadd.s32 %s22, %s23
      %s292 = smul.u32 2, %s291
      %s293 = sadd.s32 %s22, %s23
      %s294 = smul.u32 2, %s293
      %p295 = scmp.lt.s32.totalorder %s21, 1
      %s296 = scalar_select %p295, %s21, 1
      %p297 = scmp.lt.s32.totalorder %s294, 1
      %s298 = scalar_select %p297, %s294, 1
      %s299 = smul.addr %s296, 2
      %s300 = sadd.s32 %s298, %s299
      %s301 = smul.addr %s300, 4
      %s302 = scalar_lea.vmem %s1, %s301
      %s303 = sadd.s32 %s22, %s23
      %s304 = smul.u32 2, %s303
      %p305 = scmp.lt.s32.totalorder %s21, 1
      %s306 = scalar_select %p305, %s21, 1
      %p307 = scmp.lt.s32.totalorder %s22, 0
      %s308 = scalar_select %p307, %s22, 0
      %s309 = sadd.s32 %s308, %s306
      %s310 = smul.addr %s309, 8
      %s311 = scalar_lea.vmem %s2, %s310
      %p312 = scmp.lt.s32.totalorder %s21, 1
      %s313 = scalar_select %p312, %s21, 1
      %p314 = scmp.lt.s32.totalorder %s22, 0
      %s315 = scalar_select %p314, %s22, 0
      %s316 = sadd.s32 %s315, %s313
      %s317 = smul.addr %s316, 8
      %s318 = scalar_lea.vmem %s3, %s317
      %p319 = scmp.lt.s32.totalorder %s21, 1
      %s320 = scalar_select %p319, %s21, 1
      %p321 = scmp.lt.s32.totalorder %s22, 0
      %s322 = scalar_select %p321, %s22, 0
      %s323 = sadd.s32 %s322, %s320
      %s324 = smul.addr %s323, 8
      %s325 = scalar_lea.vmem %s4, %s324
      %p326 = scmp.eq.s32.totalorder %s23, 0
      // Predicated region
      $region29: #{at_loss.1} parent=27 // pred_check
        %p327 = pneg %p326
      $region30: #{at_loss.1} parent=27 // pred_check_branch
        %329 = sbr.rel (%p327) target = $region32
      $region31: #{at_loss.1} parent=27 // pred_region
        %v330 = vlaneseq
        %vm331 = vcmp.ge.s32.totalorder %v330, 0
        %vm332 = vcmp.lt.s32.totalorder %v330, 256
        %vm333 = vmand %vm331, %vm332
        %334 = vst.msk [vmem:[#allocation2] sm:$0x3] %vm333, 0.0
        %335 = vst.msk [vmem:[#allocation3] sm:$0x3] %vm333, 0.0
        %336 = vst.msk [vmem:[#allocation4] sm:$0x3] %vm333, 0.0
      $region32: #{at_loss.1} parent=27 // pred_fallthru
        _
      %v337 = vld [vmem:[%s290] sm:$0xff]
      %v338 = vld [vmem:[%s302] sm:$0xff]
      %v339 = vmul.f32 %v337, %v337
      %341 = vst [vmem:[#allocation1] ss:$2 sm:$0xff] %v339
      %v342 = vld.sshfl [vmem:[#allocation1] sm:$0xff pattern:$0x75316420]
      %v343 = vld.sshfl [vmem:[#allocation1 + $0x8] sm:$0xff pattern:$0x75316420]
      %vm346 = vcmask 1043456
      %v347 = vsel %vm346, %v342, 0.0
      %v348 = vrot.slane %v347, 4
      %v349 = vadd.f32 %v347, %v348
      %v350 = vrot.slane %v349, 2
      %v351 = vadd.f32 %v349, %v350
      %v352 = vrot.slane %v351, 1
      %v353 = vadd.f32 %v351, %v352
      %v354 = vsel %vm346, %v343, 0.0
      %v355 = vrot.slane %v354, 4
      %v356 = vadd.f32 %v354, %v355
      %v357 = vrot.slane %v356, 2
      %v358 = vadd.f32 %v356, %v357
      %v359 = vrot.slane %v358, 1
      %v360 = vadd.f32 %v358, %v359
      %v361 = vmul.f32 %v338, %v338
      %363 = vst [vmem:[#allocation1] ss:$2 sm:$0xff] %v361
      %v364 = vld.sshfl [vmem:[#allocation1] sm:$0xff pattern:$0x75316420]
      %v365 = vld.sshfl [vmem:[#allocation1 + $0x8] sm:$0xff pattern:$0x75316420]
      %v368 = vsel %vm346, %v364, 0.0
      %v369 = vrot.slane %v368, 4
      %v370 = vadd.f32 %v368, %v369
      %v371 = vrot.slane %v370, 2
      %v372 = vadd.f32 %v370, %v371
      %v373 = vrot.slane %v372, 1
      %v374 = vadd.f32 %v372, %v373
      %v375 = vsel %vm346, %v365, 0.0
      %v376 = vrot.slane %v375, 4
      %v377 = vadd.f32 %v375, %v376
      %v378 = vrot.slane %v377, 2
      %v379 = vadd.f32 %v377, %v378
      %v380 = vrot.slane %v379, 1
      %v381 = vadd.f32 %v379, %v380
      %v382 = vld [vmem:[#allocation2] sm:$0x3]
      %v383 = vmul.f32 %v353, %v353
      %v384 = vmul.f32 %v360, %v360
      %v387 = vrot.slane %v384, 7
      %vm388 = vcmask 1040384
      %v389 = vsel %vm388, %v383, %v387
      %v391 = vadd.f32 %v382, %v389
      %v392 = vlaneseq
      %vm393 = vcmp.ge.s32.totalorder %v392, 0
      %vm394 = vcmp.lt.s32.totalorder %v392, 256
      %vm395 = vmand %vm393, %vm394
      %396 = vst.msk [vmem:[#allocation2] sm:$0x3] %vm395, %v391
      %v397 = vld [vmem:[#allocation3] sm:$0x3]
      %v398 = vmul.f32 %v374, %v374
      %v399 = vmul.f32 %v381, %v381
      %v402 = vrot.slane %v399, 7
      %v403 = vsel %vm388, %v398, %v402
      %v405 = vadd.f32 %v397, %v403
      %406 = vst.msk [vmem:[#allocation3] sm:$0x3] %vm395, %v405
      %v407 = vld [vmem:[#allocation4] sm:$0x3]
      %v408 = vmul.f32 %v353, %v374
      %v409 = vmul.f32 %v360, %v381
      %v412 = vrot.slane %v409, 7
      %v413 = vsel %vm388, %v408, %v412
      %v415 = vadd.f32 %v407, %v413
      %416 = vst.msk [vmem:[#allocation4] sm:$0x3] %vm395, %v415
      // Predicated region
      $region33: #{at_loss.1} parent=27 // pred_check
        %p417 = pneg %p326
      $region34: #{at_loss.1} parent=27 // pred_check_branch
        %419 = sbr.rel (%p417) target = $region36
      $region35: #{at_loss.1} parent=27 // pred_region
        %v420 = vld [vmem:[#allocation2] sm:$0x3]
        %v422 = vperm.slane %v420, 0
        %v423 = vperm.slane %v420, 1
        %v426 = vsel %vm388, %v422, 0.0
        %v427 = vsel %vm388, %v423, 0.0
        %v428 = vadd.f32 %v426, %v427
        %429 = vadd.xlane.f32.xlu0 %v428
        %v430 = vpop.xlane.xlu0 %429
        %v431 = vld [vmem:[#allocation3] sm:$0x3]
        %v433 = vperm.slane %v431, 0
        %v434 = vperm.slane %v431, 1
        %v437 = vsel %vm388, %v433, 0.0
        %v438 = vsel %vm388, %v434, 0.0
        %v439 = vadd.f32 %v437, %v438
        %440 = vadd.xlane.f32.xlu0 %v439
        %v441 = vpop.xlane.xlu0 %440
        %v442 = vld [vmem:[#allocation4] sm:$0x3]
        %v444 = vperm.slane %v442, 0
        %v445 = vperm.slane %v442, 1
        %v448 = vsel %vm388, %v444, 0.0
        %v449 = vsel %vm388, %v445, 0.0
        %v450 = vadd.f32 %v448, %v449
        %451 = vadd.xlane.f32.xlu0 %v450
        %v452 = vpop.xlane.xlu0 %451
        %v453 = vperm.slane %v430, 0
        %454 = vst [vmem:[%s311] sm:$0xff] %v453
        %v455 = vperm.slane %v441, 0
        %456 = vst [vmem:[%s318] sm:$0xff] %v455
        %v457 = vperm.slane %v452, 0
        %458 = vst [vmem:[%s325] sm:$0xff] %v457
      $region36: #{at_loss.1} parent=27 // pred_fallthru
        _
      %p459 = scmp.lt.s32.totalorder %s21, 1
      %s460 = scalar_select %p459, %s21, 1
      %p461 = scmp.lt.s32.totalorder %s22, 0
      %s462 = scalar_select %p461, %s22, 0
      %s463 = sadd.s32 %s462, %s460
      %s464 = smul.addr %s463, 8
      %s465 = scalar_lea.vmem %s2, %s464
      %p466 = scmp.lt.s32.totalorder %s21, 1
      %s467 = scalar_select %p466, %s21, 1
      %p468 = scmp.lt.s32.totalorder %s22, 0
      %s469 = scalar_select %p468, %s22, 0
      %s470 = sadd.s32 %s469, %s467
      %s471 = smul.addr %s470, 8
      %s472 = scalar_lea.vmem %s3, %s471
      %p473 = scmp.lt.s32.totalorder %s21, 1
      %s474 = scalar_select %p473, %s21, 1
      %p475 = scmp.lt.s32.totalorder %s22, 0
      %s476 = scalar_select %p475, %s22, 0
      %s477 = sadd.s32 %s476, %s474
      %s478 = smul.addr %s477, 8
      %s479 = scalar_lea.vmem %s4, %s478
      // Predicated region
      $region37: #{at_loss.1} parent=27 // pred_check
        %p480 = pneg %p115
      $region38: #{at_loss.1} parent=27 // pred_check_branch
        %482 = sbr.rel (%p480) target = $region40
      $region39: #{at_loss.1} parent=27 // pred_region
        _
      $region40: #{at_loss.1} parent=27 // pred_fallthru
        _
      // Predicated region
      $region41: #{at_loss.1} parent=27 // pred_check
        %p483 = pneg %p143
      $region42: #{at_loss.1} parent=27 // pred_check_branch
        %485 = sbr.rel (%p483) target = $region44
      $region43: #{at_loss.1} parent=27 // pred_region
        _
      $region44: #{at_loss.1} parent=27 // pred_fallthru
        _
      // Predicated region
      $region45: #{at_loss.1} parent=27 // pred_check
        %p486 = pneg %p171
      $region46: #{at_loss.1} parent=27 // pred_check_branch
        %488 = sbr.rel (%p486) target = $region48
      $region47: #{at_loss.1} parent=27 // pred_region
        _
      $region48: #{at_loss.1} parent=27 // pred_fallthru
        _
    $region28: #{at_loss.1} parent=5 // pred_fallthru
      _
    %p489 = scmp.le.s32.totalorder 2, %s11
    // Predicated region
    $region49: #{at_loss.1} parent=5 // pred_check
      %p490 = pneg %p489
    $region50: #{at_loss.1} parent=5 // pred_check_branch
      %492 = sbr.rel (%p490) target = $region52
    $region51: #{at_loss.1} parent=5 // pred_region
      %s493 = ssub.s32 %s11, 2
      // Predicated region
      $region53: #{at_loss.1} parent=51 // pred_check
        %p494 = pneg %p121
      $region54: #{at_loss.1} parent=51 // pred_check_branch
        %496 = sbr.rel (%p494) target = $region56
      $region55: #{at_loss.1} parent=51 // pred_region
        %p497 = scmp.lt.s32.totalorder %s24, 1
        %s498 = scalar_select %p497, %s24, 1
        %p499 = scmp.lt.s32.totalorder %s25, 0
        %s500 = scalar_select %p499, %s25, 0
        %s501 = sadd.s32 %s500, %s498
        %s502 = smul.addr %s501, 8
        %s503 = scalar_lea.vmem %s2, %s502
      $region56: #{at_loss.1} parent=51 // pred_fallthru
        _
      // Predicated region
      $region57: #{at_loss.1} parent=51 // pred_check
        %p504 = pneg %p149
      $region58: #{at_loss.1} parent=51 // pred_check_branch
        %506 = sbr.rel (%p504) target = $region60
      $region59: #{at_loss.1} parent=51 // pred_region
        %p507 = scmp.lt.s32.totalorder %s24, 1
        %s508 = scalar_select %p507, %s24, 1
        %p509 = scmp.lt.s32.totalorder %s25, 0
        %s510 = scalar_select %p509, %s25, 0
        %s511 = sadd.s32 %s510, %s508
        %s512 = smul.addr %s511, 8
        %s513 = scalar_lea.vmem %s3, %s512
      $region60: #{at_loss.1} parent=51 // pred_fallthru
        _
      // Predicated region
      $region61: #{at_loss.1} parent=51 // pred_check
        %p514 = pneg %p177
      $region62: #{at_loss.1} parent=51 // pred_check_branch
        %516 = sbr.rel (%p514) target = $region64
      $region63: #{at_loss.1} parent=51 // pred_region
        %p517 = scmp.lt.s32.totalorder %s24, 1
        %s518 = scalar_select %p517, %s24, 1
        %p519 = scmp.lt.s32.totalorder %s25, 0
        %s520 = scalar_select %p519, %s25, 0
        %s521 = sadd.s32 %s520, %s518
        %s522 = smul.addr %s521, 8
        %s523 = scalar_lea.vmem %s4, %s522
      $region64: #{at_loss.1} parent=51 // pred_fallthru
        _
    $region52: #{at_loss.1} parent=5 // pred_fallthru
      _
  $region6: #{at_loss.1} parent=0 // loop_footer
    %s15 = sadd.s32 1, %s11
  $region7: #{at_loss.1} parent=0 // loop_footer_branch
    %10 = sbr.rel target = $region3
  $region8: #{at_loss.1} parent=0 // loop_exit
    _

</llo_original>
